<compile_context>
chip_gen: v7x
topology: tpu7x:2x2x1
jax: 0.10.0
libtpu: 0.0.40
codegen_flags: <defaults>
</compile_context>

<pallas_src>
import math

import jax
import jax.numpy as jnp
from jax.experimental import pallas as pl
from jax.experimental.pallas import tpu as pltpu


def _round_up(n: int, m: int) -> int:
    return ((n + m - 1) // m) * m


def _cdiv(a: int, b: int) -> int:
    return (a + b - 1) // b


def _pick_batch_tile(B_al, D, C, T, Dp, *, budget_bytes, tb_cap):
    """Pick the lane (batch) tile: as fat as the VMEM budget allows, multiple
    of 128, and small enough that the grid has >= 2 steps when B permits
    (needed to light up both TensorCores on v7x and to get pipelining)."""
    TDp = T * Dp
    # Rough per-lane live f32 bytes inside one grid step:
    #   2x double-buffered x/c input blocks + params [2*T*Dp, TB]
    #   + tanh/exp/shift intermediates (3*T*Dp) + transposed z + output row.
    bytes_per_lane = 4 * (2 * (D + C) + 5 * TDp + Dp + 1)
    tb = (budget_bytes // bytes_per_lane) // 128 * 128
    tb = min(tb_cap, max(128, tb), B_al)
    if B_al >= 256:
        tb = min(tb, _round_up(_cdiv(B_al, 2), 128))   # keep >= 2 grid steps
    return max(128, tb)


def flow_log_prob(x, c, W, b, *, tb_cap=8192, vmem_budget_bytes=16 << 20,
                  transcendental_dtype=jnp.float32):
    """NormalizingFlow(transform(c), base(c).expand(c.shape[:-1])).log_prob(x).

    x: [B, D], c: [B, C], W: [T, C, 2*D], b: [T, 2*D]  ->  [B, 1] float32
    """
    B, D = x.shape
    C = c.shape[-1]
    T = W.shape[0]
    Dp = _round_up(D, 8)          # sublane-aligned per-transform row stride
    TDp = T * Dp

    # ---- parameter restructuring (parameter-sized, done once) -------------
    # Rows [0, T*Dp): shift weights (grouped by t, then feature d);
    # rows [T*Dp, 2*T*Dp): log-scale weights. Zero-padded feature rows are
    # exact no-ops (shift=0, tanh(0)=0 -> scale=1, ladj contribution 0).
    W_shift = jnp.transpose(W[:, :, :D], (0, 2, 1))     # [T, D, C]
    W_ls = jnp.transpose(W[:, :, D:], (0, 2, 1))        # [T, D, C]
    b_shift = b[:, :D]
    b_ls = b[:, D:]
    if Dp != D:
        W_shift = jnp.pad(W_shift, ((0, 0), (0, Dp - D), (0, 0)))
        W_ls = jnp.pad(W_ls, ((0, 0), (0, Dp - D), (0, 0)))
        b_shift = jnp.pad(b_shift, ((0, 0), (0, Dp - D)))
        b_ls = jnp.pad(b_ls, ((0, 0), (0, Dp - D)))
    W_stack = jnp.concatenate(
        [W_shift.reshape(TDp, C), W_ls.reshape(TDp, C)], axis=0
    ).astype(jnp.float32)                                # [2*T*Dp, C]
    b_stack = jnp.concatenate(
        [b_shift.reshape(TDp, 1), b_ls.reshape(TDp, 1)], axis=0
    ).astype(jnp.float32)                                # [2*T*Dp, 1]

    # ---- batch handling: no transpose round-trip; pad only when unaligned --
    B_al = _round_up(B, 128)
    if B_al != B:
        x_in = jnp.pad(x, ((0, B_al - B), (0, 0)))
        c_in = jnp.pad(c, ((0, B_al - B), (0, 0)))
    else:
        x_in, c_in = x, c

    TB = _pick_batch_tile(B_al, D, C, T, Dp,
                          budget_bytes=vmem_budget_bytes, tb_cap=tb_cap)
    num_tiles = _cdiv(B_al, TB)    # edge tile (if any) is masked by Pallas

    LOG2PI = math.log(2.0 * math.pi)

    def kernel(x_ref, c_ref, w_ref, b_ref, out_ref):
        # x_ref: [TB, D]  c_ref: [TB, C]  w_ref: [2*T*Dp, C]  b_ref: [2*T*Dp, 1]
        # out_ref: [1, TB]   (lane-dense output tile)
        cblk = c_ref[...].astype(jnp.float32)

        # One fused MXU contraction for all T hyper-networks. Contracting the
        # LAST dim of both operands (like q @ k^T) avoids any explicit
        # transpose of c.
        params = jax.lax.dot_general(
            w_ref[...].astype(jnp.float32), cblk,
            dimension_numbers=(((1,), (1,)), ((), ())),
            preferred_element_type=jnp.float32)          # [2*T*Dp, TB]
        params = params + b_ref[...].astype(jnp.float32)  # lane broadcast add

        shift_all = params[:TDp, :]                       # sublane-aligned
        ls_in = params[TDp:, :]
        if transcendental_dtype != jnp.float32:
            # v6e/v7x only: bf16 EUP ~2x throughput; carries stay f32.
            ls_lo = jnp.tanh(ls_in.astype(transcendental_dtype))
            scale_all = jnp.exp(ls_lo).astype(jnp.float32)
            log_scale_all = ls_lo.astype(jnp.float32)
        else:
            log_scale_all = jnp.tanh(ls_in)               # one EUP pass
            scale_all = jnp.exp(log_scale_all)            # one EUP pass

        # Batch-on-lanes z: pad features to Dp, then transpose in-kernel (XLU).
        xblk = x_ref[...].astype(jnp.float32)             # [TB, D]
        if Dp != D:
            xblk = jnp.pad(xblk, ((0, 0), (0, Dp - D)))
        z = jnp.transpose(xblk)                           # [Dp, TB]

        # Composed affine transforms: loop carries only z (pure VPU FMAs).
        # T is small; for large T switch to lax.fori_loop(..., unroll=k).
        for t in range(T):
            lo = t * Dp
            z = z * scale_all[lo:lo + Dp, :] + shift_all[lo:lo + Dp, :]

        # Reductions hoisted out of the loop (padded rows contribute zero).
        ladj = jnp.sum(log_scale_all, axis=0, keepdims=True)            # [1, TB]
        base = -0.5 * jnp.sum(z * z, axis=0, keepdims=True) - 0.5 * D * LOG2PI
        out_ref[...] = base + ladj

    cost = pl.CostEstimate(
        flops=2 * B_al * C * 2 * TDp,
        transcendentals=2 * TDp * B_al,                   # tanh + exp per elem
        bytes_accessed=4 * (B_al * (D + C + 1) + 2 * TDp * (C + 1)),
    )

    logp = pl.pallas_call(
        kernel,
        out_shape=jax.ShapeDtypeStruct((1, B_al), jnp.float32),
        grid=(num_tiles,),
        in_specs=[
            pl.BlockSpec((TB, D), lambda i: (i, 0)),          # x (batch tiled)
            pl.BlockSpec((TB, C), lambda i: (i, 0)),          # c (batch tiled)
            pl.BlockSpec((2 * TDp, C), lambda i: (0, 0)),     # stacked weights
            pl.BlockSpec((2 * TDp, 1), lambda i: (0, 0)),     # stacked biases
        ],
        out_specs=pl.BlockSpec((1, TB), lambda i: (0, i)),    # lane-dense out
        compiler_params=pltpu.CompilerParams(
            dimension_semantics=("parallel",),
            vmem_limit_bytes=32 << 20,                        # safe on all gens
        ),
        cost_estimate=cost,
    )(x_in, c_in, W_stack, b_stack)

    return logp[0, :B].reshape(B, 1)


def flow_log_prob_ref(x, c, W, b):
    """Pure-JAX reference (same math) for a correctness check."""
    B, D = x.shape
    z = x.astype(jnp.float32)
    ladj = jnp.zeros((B, 1), jnp.float32)
    for t in range(W.shape[0]):
        params = c.astype(jnp.float32) @ W[t] + b[t]
        shift, log_scale = params[:, :D], jnp.tanh(params[:, D:])
        z = z * jnp.exp(log_scale) + shift
        ladj = ladj + jnp.sum(log_scale, axis=-1, keepdims=True)
    base_lp = -0.5 * jnp.sum(z * z, -1, keepdims=True) - 0.5 * D * math.log(2 * math.pi)
    return base_lp + ladj


if __name__ == "__main__":
    B, D, C, T = 8, 16, 4, 3  # batch, feature dim, context dim, num transforms

    key = jax.random.PRNGKey(0)
    kx, kc, kw, kb = jax.random.split(key, 4)

    # Example inputs: x ~ data, c ~ context (c.shape[:-1] == batch shape).
    x = jax.random.normal(kx, (B, D), dtype=jnp.float32)
    c = jax.random.normal(kc, (B, C), dtype=jnp.float32)

    # Deterministic synthetic hyper-network parameters (shapes from __init__
    # of a conditional affine transform stack; no checkpoint load).
    W = 0.1 * jax.random.normal(kw, (T, C, 2 * D), dtype=jnp.float32)
    b = 0.01 * jax.random.normal(kb, (T, 2 * D), dtype=jnp.float32)

    out = flow_log_prob(x, c, W, b)
    out = jax.block_until_ready(out)

    ref = flow_log_prob_ref(x, c, W, b)
    assert out.shape == (B, 1)
    assert jnp.allclose(out, ref, atol=1e-4, rtol=1e-4), (out, ref)

    # TODO(synk): `Flow.forward` also exposes sampling via inverse transforms
    # (LazyInverse / rsample); only the log_prob hot path is implemented here.
    print("KERNEL_OK")
</pallas_src>

<mosaic_0001>
module attributes {stable_mosaic.version = 11 : i64} {
  func.func @kernel(%arg0: i32, %arg1: memref<128x16xf32, #tpu.memory_space<vmem>>, %arg2: memref<128x4xf32, #tpu.memory_space<vmem>>, %arg3: memref<96x4xf32, #tpu.memory_space<vmem>>, %arg4: memref<96x1xf32, #tpu.memory_space<vmem>>, %arg5: memref<1x128xf32, #tpu.memory_space<vmem>>) attributes {dimension_semantics = [#tpu.dimension_semantics<parallel>], iteration_bounds = array<i64: 1>, scalar_prefetch = 0 : i64, scratch_operands = 0 : i64, tpu.core_type = #tpu.core_type<tc>, window_params = [{transform_indices = @transform_0, window_bounds = array<i64: 128, 16>}, {transform_indices = @transform_1, window_bounds = array<i64: 128, 4>}, {pipeline_mode = #tpu.pipeline_mode<synchronous>, transform_indices = @transform_2, window_bounds = array<i64: 96, 4>}, {pipeline_mode = #tpu.pipeline_mode<synchronous>, transform_indices = @transform_3, window_bounds = array<i64: 96, 1>}, {transform_indices = @transform_4, window_bounds = array<i64: 1, 128>}]} {
    %c0 = arith.constant 0 : index
    %c0_0 = arith.constant 0 : index
    %0 = vector.load %arg2[%c0, %c0_0] : memref<128x4xf32, #tpu.memory_space<vmem>>, vector<128x4xf32>
    %c0_1 = arith.constant 0 : index
    %c0_2 = arith.constant 0 : index
    %1 = vector.load %arg3[%c0_1, %c0_2] : memref<96x4xf32, #tpu.memory_space<vmem>>, vector<96x4xf32>
    %cst = arith.constant dense<0.000000e+00> : vector<96x128xf32>
    %2 = tpu.matmul %1, %0, %cst {dimension_numbers = #tpu.dot_dimension_numbers<[1], [1], [0], [0], [0, 0, 1, 0], [], []>} : vector<96x4xf32>, vector<128x4xf32>, vector<96x128xf32> -> vector<96x128xf32>
    %c0_3 = arith.constant 0 : index
    %c0_4 = arith.constant 0 : index
    %3 = vector.load %arg4[%c0_3, %c0_4] : memref<96x1xf32, #tpu.memory_space<vmem>>, vector<96x1xf32>
    %4 = vector.broadcast %3 : vector<96x1xf32> to vector<96x128xf32>
    %5 = arith.addf %2, %4 : vector<96x128xf32>
    %6 = vector.extract_strided_slice %5 {offsets = [0, 0], sizes = [48, 128], strides = [1, 1]} : vector<96x128xf32> to vector<48x128xf32>
    %7 = vector.extract_strided_slice %5 {offsets = [48, 0], sizes = [48, 128], strides = [1, 1]} : vector<96x128xf32> to vector<48x128xf32>
    %8 = math.tanh %7 : vector<48x128xf32>
    %9 = math.exp %8 : vector<48x128xf32>
    %c0_5 = arith.constant 0 : index
    %c0_6 = arith.constant 0 : index
    %10 = vector.load %arg1[%c0_5, %c0_6] : memref<128x16xf32, #tpu.memory_space<vmem>>, vector<128x16xf32>
    %11 = tpu.transpose %10, [1, 0] : vector<128x16xf32> -> vector<16x128xf32>
    %12 = vector.extract_strided_slice %9 {offsets = [0, 0], sizes = [16, 128], strides = [1, 1]} : vector<48x128xf32> to vector<16x128xf32>
    %13 = arith.mulf %11, %12 : vector<16x128xf32>
    %14 = vector.extract_strided_slice %6 {offsets = [0, 0], sizes = [16, 128], strides = [1, 1]} : vector<48x128xf32> to vector<16x128xf32>
    %15 = arith.addf %13, %14 : vector<16x128xf32>
    %16 = vector.extract_strided_slice %9 {offsets = [16, 0], sizes = [16, 128], strides = [1, 1]} : vector<48x128xf32> to vector<16x128xf32>
    %17 = arith.mulf %15, %16 : vector<16x128xf32>
    %18 = vector.extract_strided_slice %6 {offsets = [16, 0], sizes = [16, 128], strides = [1, 1]} : vector<48x128xf32> to vector<16x128xf32>
    %19 = arith.addf %17, %18 : vector<16x128xf32>
    %20 = vector.extract_strided_slice %9 {offsets = [32, 0], sizes = [16, 128], strides = [1, 1]} : vector<48x128xf32> to vector<16x128xf32>
    %21 = arith.mulf %19, %20 : vector<16x128xf32>
    %22 = vector.extract_strided_slice %6 {offsets = [32, 0], sizes = [16, 128], strides = [1, 1]} : vector<48x128xf32> to vector<16x128xf32>
    %23 = arith.addf %21, %22 : vector<16x128xf32>
    %cst_7 = arith.constant dense<0.000000e+00> : vector<128xf32>
    %24 = vector.multi_reduction <add>, %8, %cst_7 [0] : vector<48x128xf32> to vector<128xf32>
    %25 = vector.shape_cast %24 : vector<128xf32> to vector<1x128xf32>
    %26 = arith.mulf %23, %23 : vector<16x128xf32>
    %cst_8 = arith.constant dense<0.000000e+00> : vector<128xf32>
    %27 = vector.multi_reduction <add>, %26, %cst_8 [0] : vector<16x128xf32> to vector<128xf32>
    %28 = vector.shape_cast %27 : vector<128xf32> to vector<1x128xf32>
    %cst_9 = arith.constant -5.000000e-01 : f32
    %29 = vector.broadcast %cst_9 : f32 to vector<1x128xf32>
    %30 = arith.mulf %29, %28 : vector<1x128xf32>
    %cst_10 = arith.constant 14.7030163 : f32
    %31 = vector.broadcast %cst_10 : f32 to vector<1x128xf32>
    %32 = arith.subf %30, %31 : vector<1x128xf32>
    %33 = arith.addf %32, %25 : vector<1x128xf32>
    %c0_11 = arith.constant 0 : index
    %c0_12 = arith.constant 0 : index
    %34 = vector.load %arg5[%c0_11, %c0_12] : memref<1x128xf32, #tpu.memory_space<vmem>>, vector<1x128xf32>
    tpu.vector_store %arg5[%c0_11, %c0_12], %33 {strides = array<i32>} : memref<1x128xf32, #tpu.memory_space<vmem>>, vector<1x128xf32>,
    return
  }
  func.func @transform_0(%arg0: i32) -> (i32, i32) {
    %c0_i32 = arith.constant 0 : i32
    %c0_i32_0 = arith.constant 0 : i32
    return %arg0, %c0_i32 : i32, i32
  }
  func.func @transform_1(%arg0: i32) -> (i32, i32) {
    %c0_i32 = arith.constant 0 : i32
    %c0_i32_0 = arith.constant 0 : i32
    return %arg0, %c0_i32 : i32, i32
  }
  func.func @transform_2(%arg0: i32) -> (i32, i32) {
    %c0_i32 = arith.constant 0 : i32
    %c0_i32_0 = arith.constant 0 : i32
    %c0_i32_1 = arith.constant 0 : i32
    return %c0_i32, %c0_i32_0 : i32, i32
  }
  func.func @transform_3(%arg0: i32) -> (i32, i32) {
    %c0_i32 = arith.constant 0 : i32
    %c0_i32_0 = arith.constant 0 : i32
    %c0_i32_1 = arith.constant 0 : i32
    return %c0_i32, %c0_i32_0 : i32, i32
  }
  func.func @transform_4(%arg0: i32) -> (i32, i32) {
    %c0_i32 = arith.constant 0 : i32
    %c0_i32_0 = arith.constant 0 : i32
    return %c0_i32, %arg0 : i32, i32
  }
}

</mosaic_0001>

<llo_original>
// kernel: tpu_custom_call.1
$region0: #{tpu_custom_call.1}
  #allocation0 [shape = 'u32[]', space=smem, size = 0x4, offset = 0x4, fixed_abs, tag = 'smem constant byte address 0x4 - core index']
  #allocation1 [shape = 'u32[144,128]{1,0:T(1,128)}', space=vmem, size = 0x12000, scoped, tag = 'internal scratch']
  %s0 = inlined_call_operand.vmem [shape: f32[128,16], index: 0, kind: input, shape index: {}]
  %s1 = inlined_call_operand.vmem [shape: f32[128,4], index: 1, kind: input, shape index: {}]
  %s2 = inlined_call_operand.vmem [shape: f32[96,4], index: 2, kind: input, shape index: {}]
  %s3 = inlined_call_operand.vmem [shape: f32[96,1], index: 3, kind: input, shape index: {}]
  %s4 = inlined_call_operand.hbm [shape: f32[1,128], index: 4, kind: output, shape index: {}]
  %s5 = sld [smem:[#allocation0]]
  $region26: #{tpu_custom_call.1} parent=0
    _
  %s7 = ssub.s32 1, %s5
  %s8 = scalar_select 0, %s7, %s5
  $region1: #{tpu_custom_call.1} parent=0
    #allocation2 [shape = 'u8[512]{0}', space=vmem, size = 0x400, scoped, tag = 'output window, operand 0, single buffered']
    #allocation3 [shape = 's32[1]{0}', space=sflag, size = 0x4, scoped, tag = 'scoped memory for tpu_custom_call.1']
    %9 = vsyncpa [#allocation3], 0
    // Predicated region
    $region2: #{tpu_custom_call.1} parent=1 // pred_check
      _
    $region3: #{tpu_custom_call.1} parent=1 // pred_check_branch
      %11 = sbr.rel (0) target = $region5
    $region4: #{tpu_custom_call.1} parent=1 // pred_region
      _
    $region5: #{tpu_custom_call.1} parent=1 // pred_fallthru
      _
    // Predicated region
    $region6: #{tpu_custom_call.1} parent=1 // pred_check
      _
    $region7: #{tpu_custom_call.1} parent=1 // pred_check_branch
      %13 = sbr.rel (0) target = $region9
    $region8: #{tpu_custom_call.1} parent=1 // pred_region
      _
    $region9: #{tpu_custom_call.1} parent=1 // pred_fallthru
      _
    // Predicated region
    $region10: #{tpu_custom_call.1} parent=1 // pred_check
      _
    $region11: #{tpu_custom_call.1} parent=1 // pred_check_branch
      %15 = sbr.rel (0) target = $region13
    $region12: #{tpu_custom_call.1} parent=1 // pred_region
      _
    $region13: #{tpu_custom_call.1} parent=1 // pred_fallthru
      _
    // Predicated region
    $region14: #{tpu_custom_call.1} parent=1 // pred_check
      _
    $region15: #{tpu_custom_call.1} parent=1 // pred_check_branch
      %17 = sbr.rel (0) target = $region17
    $region16: #{tpu_custom_call.1} parent=1 // pred_region
      _
    $region17: #{tpu_custom_call.1} parent=1 // pred_fallthru
      _
    %v18 = vld [vmem:[%s1] sm:$0xff]
    %v19 = vld [vmem:[%s1 + $0x8] sm:$0xff]
    %v20 = vld [vmem:[%s1 + $0x10] sm:$0xff]
    %v21 = vld [vmem:[%s1 + $0x18] sm:$0xff]
    %v22 = vld [vmem:[%s1 + $0x20] sm:$0xff]
    %v23 = vld [vmem:[%s1 + $0x28] sm:$0xff]
    %v24 = vld [vmem:[%s1 + $0x30] sm:$0xff]
    %v25 = vld [vmem:[%s1 + $0x38] sm:$0xff]
    %v26 = vld [vmem:[%s1 + $0x40] sm:$0xff]
    %v27 = vld [vmem:[%s1 + $0x48] sm:$0xff]
    %v28 = vld [vmem:[%s1 + $0x50] sm:$0xff]
    %v29 = vld [vmem:[%s1 + $0x58] sm:$0xff]
    %v30 = vld [vmem:[%s1 + $0x60] sm:$0xff]
    %v31 = vld [vmem:[%s1 + $0x68] sm:$0xff]
    %v32 = vld [vmem:[%s1 + $0x70] sm:$0xff]
    %v33 = vld [vmem:[%s1 + $0x78] sm:$0xff]
    %v34 = vld [vmem:[%s2] sm:$0xff]
    %v35 = vld [vmem:[%s2 + $0x8] sm:$0xff]
    %v36 = vld [vmem:[%s2 + $0x10] sm:$0xff]
    %v37 = vld [vmem:[%s2 + $0x18] sm:$0xff]
    %v38 = vld [vmem:[%s2 + $0x20] sm:$0xff]
    %v39 = vld [vmem:[%s2 + $0x28] sm:$0xff]
    %v40 = vld [vmem:[%s2 + $0x30] sm:$0xff]
    %v41 = vld [vmem:[%s2 + $0x38] sm:$0xff]
    %v42 = vld [vmem:[%s2 + $0x40] sm:$0xff]
    %v43 = vld [vmem:[%s2 + $0x48] sm:$0xff]
    %v44 = vld [vmem:[%s2 + $0x50] sm:$0xff]
    %v45 = vld [vmem:[%s2 + $0x58] sm:$0xff]
    %v46 = vld [vmem:[%s3] sm:$0xff]
    %v47 = vld [vmem:[%s3 + $0x8] sm:$0xff]
    %v48 = vld [vmem:[%s3 + $0x10] sm:$0xff]
    %v49 = vld [vmem:[%s3 + $0x18] sm:$0xff]
    %v50 = vld [vmem:[%s3 + $0x20] sm:$0xff]
    %v51 = vld [vmem:[%s3 + $0x28] sm:$0xff]
    %v52 = vld [vmem:[%s3 + $0x30] sm:$0xff]
    %v53 = vld [vmem:[%s3 + $0x38] sm:$0xff]
    %v54 = vld [vmem:[%s3 + $0x40] sm:$0xff]
    %v55 = vld [vmem:[%s3 + $0x48] sm:$0xff]
    %v56 = vld [vmem:[%s3 + $0x50] sm:$0xff]
    %v57 = vld [vmem:[%s3 + $0x58] sm:$0xff]
    %59 = vset.pattern.permute.xlu0 0
    %60 = vperm.xlu0 %59, %v46
    %v61 = vpop.permute.xlu0 %60
    %64 = vset.pattern.permute.xlu0 0
    %65 = vperm.xlu0 %64, %v47
    %v66 = vpop.permute.xlu0 %65
    %69 = vset.pattern.permute.xlu0 0
    %70 = vperm.xlu0 %69, %v48
    %v71 = vpop.permute.xlu0 %70
    %74 = vset.pattern.permute.xlu0 0
    %75 = vperm.xlu0 %74, %v49
    %v76 = vpop.permute.xlu0 %75
    %79 = vset.pattern.permute.xlu0 0
    %80 = vperm.xlu0 %79, %v50
    %v81 = vpop.permute.xlu0 %80
    %84 = vset.pattern.permute.xlu0 0
    %85 = vperm.xlu0 %84, %v51
    %v86 = vpop.permute.xlu0 %85
    %89 = vset.pattern.permute.xlu0 0
    %90 = vperm.xlu0 %89, %v52
    %v91 = vpop.permute.xlu0 %90
    %94 = vset.pattern.permute.xlu0 0
    %95 = vperm.xlu0 %94, %v53
    %v96 = vpop.permute.xlu0 %95
    %99 = vset.pattern.permute.xlu0 0
    %100 = vperm.xlu0 %99, %v54
    %v101 = vpop.permute.xlu0 %100
    %104 = vset.pattern.permute.xlu0 0
    %105 = vperm.xlu0 %104, %v55
    %v106 = vpop.permute.xlu0 %105
    %109 = vset.pattern.permute.xlu0 0
    %110 = vperm.xlu0 %109, %v56
    %v111 = vpop.permute.xlu0 %110
    %114 = vset.pattern.permute.xlu0 0
    %115 = vperm.xlu0 %114, %v57
    %v116 = vpop.permute.xlu0 %115
    %vm118 = vcmask 31744
    %v120 = vsel %vm118, %v34, 0
    %v123 = vsel %vm118, %v35, 0
    %v126 = vsel %vm118, %v36, 0
    %v129 = vsel %vm118, %v37, 0
    %v132 = vsel %vm118, %v38, 0
    %v135 = vsel %vm118, %v39, 0
    %v138 = vsel %vm118, %v40, 0
    %v141 = vsel %vm118, %v41, 0
    %v144 = vsel %vm118, %v42, 0
    %v147 = vsel %vm118, %v43, 0
    %v150 = vsel %vm118, %v44, 0
    %v153 = vsel %vm118, %v45, 0
    %v156 = vsel %vm118, %v18, 0
    %v159 = vsel %vm118, %v19, 0
    %v162 = vsel %vm118, %v20, 0
    %v165 = vsel %vm118, %v21, 0
    %v168 = vsel %vm118, %v22, 0
    %v171 = vsel %vm118, %v23, 0
    %v174 = vsel %vm118, %v24, 0
    %v177 = vsel %vm118, %v25, 0
    %v180 = vsel %vm118, %v26, 0
    %v183 = vsel %vm118, %v27, 0
    %v186 = vsel %vm118, %v28, 0
    %v189 = vsel %vm118, %v29, 0
    %v192 = vsel %vm118, %v30, 0
    %v195 = vsel %vm118, %v31, 0
    %v198 = vsel %vm118, %v32, 0
    %v201 = vsel %vm118, %v33, 0
    %203 = vmatprep.subr.mxu0 0.0
    %204 = vmatpush1.xpose.msra.mxu0 %v156
    %205 = vmatprep.subr.mxu0 0.0
    %206 = vmatpush1.xpose.msra.mxu0 %v159
    %207 = vmatprep.subr.mxu0 0.0
    %208 = vmatpush1.xpose.msra.mxu0 %v162
    %209 = vmatprep.subr.mxu0 0.0
    %210 = vmatpush1.xpose.msra.mxu0 %v165
    %211 = vmatprep.subr.mxu0 0.0
    %212 = vmatpush1.xpose.msra.mxu0 %v168
    %213 = vmatprep.subr.mxu0 0.0
    %214 = vmatpush1.xpose.msra.mxu0 %v171
    %215 = vmatprep.subr.mxu0 0.0
    %216 = vmatpush1.xpose.msra.mxu0 %v174
    %217 = vmatprep.subr.mxu0 0.0
    %218 = vmatpush1.xpose.msra.mxu0 %v177
    %219 = vmatprep.subr.mxu0 0.0
    %220 = vmatpush1.xpose.msra.mxu0 %v180
    %221 = vmatprep.subr.mxu0 0.0
    %222 = vmatpush1.xpose.msra.mxu0 %v183
    %223 = vmatprep.subr.mxu0 0.0
    %224 = vmatpush1.xpose.msra.mxu0 %v186
    %225 = vmatprep.subr.mxu0 0.0
    %226 = vmatpush1.xpose.msra.mxu0 %v189
    %227 = vmatprep.subr.mxu0 0.0
    %228 = vmatpush1.xpose.msra.mxu0 %v192
    %229 = vmatprep.subr.mxu0 0.0
    %230 = vmatpush1.xpose.msra.mxu0 %v195
    %231 = vmatprep.subr.mxu0 0.0
    %232 = vmatpush1.xpose.msra.mxu0 %v198
    %233 = vmatprep.subr.mxu0 0.0
    %234 = vmatpush1.xpose.msra.mxu0 %v201
    %235 = vmatprep.subr.mxu0 0.0
    %236 = vmatpush1.xpose.msra.mxu0 0.0
    %237 = vmatprep.subr.mxu0 0.0
    %238 = vmatpush1.xpose.msra.mxu0 0.0
    %239 = vmatprep.subr.mxu0 0.0
    %240 = vmatpush1.xpose.msra.mxu0 0.0
    %241 = vmatprep.subr.mxu0 0.0
    %242 = vmatpush1.xpose.msra.mxu0 0.0
    %243 = vmatprep.subr.mxu0 0.0
    %244 = vmatpush1.xpose.msra.mxu0 0.0
    %245 = vmatprep.subr.mxu0 0.0
    %246 = vmatpush1.xpose.msra.mxu0 0.0
    %247 = vmatprep.subr.mxu0 0.0
    %248 = vmatpush1.xpose.msra.mxu0 0.0
    %249 = vmatprep.subr.mxu0 0.0
    %250 = vmatpush1.xpose.msra.mxu0 0.0
    %251 = vmatprep.subr.mxu0 0.0
    %252 = vmatpush1.xpose.msra.mxu0 0.0
    %253 = vmatprep.subr.mxu0 0.0
    %254 = vmatpush1.xpose.msra.mxu0 0.0
    %255 = vmatprep.subr.mxu0 0.0
    %256 = vmatpush1.xpose.msra.mxu0 0.0
    %257 = vmatprep.subr.mxu0 0.0
    %258 = vmatpush1.xpose.msra.mxu0 0.0
    %259 = vmatprep.subr.mxu0 0.0
    %260 = vmatpush1.xpose.msra.mxu0 0.0
    %261 = vmatprep.subr.mxu0 0.0
    %262 = vmatpush1.xpose.msra.mxu0 0.0
    %263 = vmatprep.subr.mxu0 0.0
    %264 = vmatpush1.xpose.msra.mxu0 0.0
    %265 = vmatprep.subr.mxu0 0.0
    %266 = vmatpush1.xpose.msra.mxu0 0.0
    %267 = vmatprep.mubr.f32.mxu0 0.0
    %268 = vmatmul.mubr.f32.gmra.mrb[0].mxu0 %v120
    %v269 = vpop.f32.mrb[0].mxu0
    %v270 = vadd.f32 %v61, %v269
    %v271 = vpop.f32.mrb[0].mxu0
    %272 = vmatprep.mubr.f32.mxu0 0.0
    %273 = vmatmul.mubr.f32.gmra.mrb[0].mxu0 %v123
    %v274 = vpop.f32.mrb[0].mxu0
    %v275 = vadd.f32 %v66, %v274
    %v276 = vpop.f32.mrb[0].mxu0
    %277 = vmatprep.mubr.f32.mxu0 0.0
    %278 = vmatmul.mubr.f32.gmra.mrb[0].mxu0 %v126
    %v279 = vpop.f32.mrb[0].mxu0
    %v280 = vadd.f32 %v71, %v279
    %v281 = vpop.f32.mrb[0].mxu0
    %282 = vmatprep.mubr.f32.mxu0 0.0
    %283 = vmatmul.mubr.f32.gmra.mrb[0].mxu0 %v129
    %v284 = vpop.f32.mrb[0].mxu0
    %v285 = vadd.f32 %v76, %v284
    %v286 = vpop.f32.mrb[0].mxu0
    %287 = vmatprep.mubr.f32.mxu0 0.0
    %288 = vmatmul.mubr.f32.gmra.mrb[0].mxu0 %v132
    %v289 = vpop.f32.mrb[0].mxu0
    %v290 = vadd.f32 %v81, %v289
    %v291 = vpop.f32.mrb[0].mxu0
    %292 = vmatprep.mubr.f32.mxu0 0.0
    %293 = vmatmul.mubr.f32.gmra.mrb[0].mxu0 %v135
    %v294 = vpop.f32.mrb[0].mxu0
    %v295 = vadd.f32 %v86, %v294
    %v296 = vpop.f32.mrb[0].mxu0
    %297 = vmatprep.mubr.f32.mxu0 0.0
    %298 = vmatmul.mubr.f32.gmra.mrb[0].mxu0 %v138
    %v299 = vpop.f32.mrb[0].mxu0
    %v300 = vadd.f32 %v91, %v299
    %v301 = vpop.f32.mrb[0].mxu0
    %302 = vmatprep.mubr.f32.mxu0 0.0
    %303 = vmatmul.mubr.f32.gmra.mrb[0].mxu0 %v141
    %v304 = vpop.f32.mrb[0].mxu0
    %v305 = vadd.f32 %v96, %v304
    %v306 = vpop.f32.mrb[0].mxu0
    %307 = vmatprep.mubr.f32.mxu0 0.0
    %308 = vmatmul.mubr.f32.gmra.mrb[0].mxu0 %v144
    %v309 = vpop.f32.mrb[0].mxu0
    %v310 = vadd.f32 %v101, %v309
    %v311 = vpop.f32.mrb[0].mxu0
    %312 = vmatprep.mubr.f32.mxu0 0.0
    %313 = vmatmul.mubr.f32.gmra.mrb[0].mxu0 %v147
    %v314 = vpop.f32.mrb[0].mxu0
    %v315 = vadd.f32 %v106, %v314
    %v316 = vpop.f32.mrb[0].mxu0
    %317 = vmatprep.mubr.f32.mxu0 0.0
    %318 = vmatmul.mubr.f32.gmra.mrb[0].mxu0 %v150
    %v319 = vpop.f32.mrb[0].mxu0
    %v320 = vadd.f32 %v111, %v319
    %v321 = vpop.f32.mrb[0].mxu0
    %322 = vmatprep.mubr.f32.mxu0 0.0
    %323 = vmatmul.mubr.f32.gmra.mrb[0].mxu0 %v153
    %v324 = vpop.f32.mrb[0].mxu0
    %v325 = vadd.f32 %v116, %v324
    %v326 = vpop.f32.mrb[0].mxu0
    %327 = vdwg.mxu0
    %v328 = vtanh.pop %v300
    %v329 = vtanh.pop %v305
    %v330 = vtanh.pop %v310
    %v331 = vtanh.pop %v315
    %v332 = vtanh.pop %v320
    %v333 = vtanh.pop %v325
    %v334 = vmul.f32 %v328, 1.442695
    %v335 = vpow.pop %v334
    %v336 = vmul.f32 %v329, 1.442695
    %v337 = vpow.pop %v336
    %v338 = vmul.f32 %v330, 1.442695
    %v339 = vpow.pop %v338
    %v340 = vmul.f32 %v331, 1.442695
    %v341 = vpow.pop %v340
    %v342 = vmul.f32 %v332, 1.442695
    %v343 = vpow.pop %v342
    %v344 = vmul.f32 %v333, 1.442695
    %v345 = vpow.pop %v344
    %v346 = vld [vmem:[%s0] sm:$0xff]
    %v347 = vld [vmem:[%s0 + $0x8] sm:$0xff]
    %v348 = vld [vmem:[%s0 + $0x10] sm:$0xff]
    %v349 = vld [vmem:[%s0 + $0x18] sm:$0xff]
    %v350 = vld [vmem:[%s0 + $0x20] sm:$0xff]
    %v351 = vld [vmem:[%s0 + $0x28] sm:$0xff]
    %v352 = vld [vmem:[%s0 + $0x30] sm:$0xff]
    %v353 = vld [vmem:[%s0 + $0x38] sm:$0xff]
    %v354 = vld [vmem:[%s0 + $0x40] sm:$0xff]
    %v355 = vld [vmem:[%s0 + $0x48] sm:$0xff]
    %v356 = vld [vmem:[%s0 + $0x50] sm:$0xff]
    %v357 = vld [vmem:[%s0 + $0x58] sm:$0xff]
    %v358 = vld [vmem:[%s0 + $0x60] sm:$0xff]
    %v359 = vld [vmem:[%s0 + $0x68] sm:$0xff]
    %v360 = vld [vmem:[%s0 + $0x70] sm:$0xff]
    %v361 = vld [vmem:[%s0 + $0x78] sm:$0xff]
    %362 = vxpose.xlu0.b32.start [1/16] %v346, 128
    %363 = vxpose.xlu0.b32.cont [2/16] %v347, 128
    %364 = vxpose.xlu0.b32.cont [3/16] %v348, 128
    %365 = vxpose.xlu0.b32.cont [4/16] %v349, 128
    %366 = vxpose.xlu0.b32.cont [5/16] %v350, 128
    %367 = vxpose.xlu0.b32.cont [6/16] %v351, 128
    %368 = vxpose.xlu0.b32.cont [7/16] %v352, 128
    %369 = vxpose.xlu0.b32.cont [8/16] %v353, 128
    %370 = vxpose.xlu0.b32.cont [9/16] %v354, 128
    %371 = vxpose.xlu0.b32.cont [10/16] %v355, 128
    %372 = vxpose.xlu0.b32.cont [11/16] %v356, 128
    %373 = vxpose.xlu0.b32.cont [12/16] %v357, 128
    %374 = vxpose.xlu0.b32.cont [13/16] %v358, 128
    %375 = vxpose.xlu0.b32.cont [14/16] %v359, 128
    %376 = vxpose.xlu0.b32.cont [15/16] %v360, 128
    %377 = vxpose.xlu0.b32.end [16/16] %v361, 128
    %v378 = vpop.trf.xlu0
    %v379 = vpop.trf.xlu0
    %v380 = vpop.trf.xlu0
    %v381 = vpop.trf.xlu0
    %v382 = vpop.trf.xlu0
    %v383 = vpop.trf.xlu0
    %v384 = vpop.trf.xlu0
    %v385 = vpop.trf.xlu0
    %v386 = vpop.trf.xlu0
    %v387 = vpop.trf.xlu0
    %v388 = vpop.trf.xlu0
    %v389 = vpop.trf.xlu0
    %v390 = vpop.trf.xlu0
    %v391 = vpop.trf.xlu0
    %v392 = vpop.trf.xlu0
    %v393 = vpop.trf.xlu0
    %v394 = vmul.f32 %v378, %v335
    %v395 = vmul.f32 %v379, %v337
    %v396 = vadd.f32 %v394, %v270
    %v397 = vadd.f32 %v395, %v275
    %v398 = vmul.f32 %v396, %v339
    %v399 = vmul.f32 %v397, %v341
    %v400 = vadd.f32 %v398, %v280
    %v401 = vadd.f32 %v399, %v285
    %v402 = vmul.f32 %v400, %v343
    %v403 = vmul.f32 %v401, %v345
    %v404 = vadd.f32 %v402, %v290
    %v405 = vadd.f32 %v403, %v295
    %v406 = vadd.f32 %v328, %v329
    %v407 = vadd.f32 %v406, %v330
    %v408 = vadd.f32 %v407, %v331
    %v409 = vadd.f32 %v408, %v332
    %v410 = vadd.f32 %v409, %v333
    %v411 = vrot.slane %v410, 4
    %v412 = vadd.f32 %v410, %v411
    %v413 = vrot.slane %v412, 2
    %v414 = vadd.f32 %v412, %v413
    %v415 = vrot.slane %v414, 1
    %v416 = vadd.f32 %v414, %v415
    %v417 = vmul.f32 %v404, %v404
    %v418 = vmul.f32 %v405, %v405
    %v419 = vadd.f32 %v417, %v418
    %v420 = vrot.slane %v419, 4
    %v421 = vadd.f32 %v419, %v420
    %v422 = vrot.slane %v421, 2
    %v423 = vadd.f32 %v421, %v422
    %v424 = vrot.slane %v423, 1
    %v425 = vadd.f32 %v423, %v424
    %v426 = vmul.f32 %v425, -0.5
    %v427 = vsub.f32 %v426, 14.703016
    %v428 = vadd.f32 %v427, %v416
    %429 = vst [vmem:[#allocation2] sm:$0x1] %v428
    // Predicated region
    $region18: #{tpu_custom_call.1} parent=1 // pred_check
      _
    $region19: #{tpu_custom_call.1} parent=1 // pred_check_branch
      %431 = sbr.rel (0) target = $region21
    $region20: #{tpu_custom_call.1} parent=1 // pred_region
      %s433 = ssub.s32 16, 16
      %434 = vsyncadd [#allocation3], %s433
      %s436 = sshll.u32 [#allocation2], 4
      %s437 = int_to_ptr.vmem [resolvable:$true] %s436
      %439 = dma.vmem_to_hbm [thread:$0]  %s437, 16, %s4, [#allocation3]
    $region21: #{tpu_custom_call.1} parent=1 // pred_fallthru
      _
    // Predicated region
    $region22: #{tpu_custom_call.1} parent=1 // pred_check
      _
    $region23: #{tpu_custom_call.1} parent=1 // pred_check_branch
      %441 = sbr.rel (0) target = $region25
    $region24: #{tpu_custom_call.1} parent=1 // pred_region
      %442 = dma.done [#allocation3], 16
    $region25: #{tpu_custom_call.1} parent=1 // pred_fallthru
      _
    %443 = vsyncpa [#allocation3], 1

</llo_original>
